<compile_context>
chip_gen: v5e
topology: v5e:2x2
jax: 0.10.0
libtpu: 0.0.40
codegen_flags: <defaults>
</compile_context>

<pallas_src>
import jax
import jax.numpy as jnp
from jax.experimental import pallas as pl
from jax.experimental.pallas import tpu as pltpu


def _round_up(x, m):
    return ((x + m - 1) // m) * m


def _choose_block_b(B, D):
    """Batch tile size: ~2 MiB of f32 x per grid step, >= 4 tiles when B allows."""
    target_rows = _round_up(max(128, (2 << 20) // max(1, 4 * D)), 128)
    target_rows = min(target_rows, 16384)
    # Keep several tiles for large batches so the "parallel" axis can feed both
    # TensorCores on v7x (and the pipeline has something to overlap).
    want = _round_up(pl.cdiv(B, 4), 128)
    return max(128, min(target_rows, want))


def _mlp_kernel(x_ref, w1_ref, b1_ref, w2_ref, b2_ref, w3_ref, b3_ref,
                w4_ref, b4_ref, o_ref):
    # x tile: (block_b, D) f32, batch rows on sublanes.
    x = x_ref[...]

    # fc1 as W1 @ x^T: contract last dims of (64, D) and (block_b, D) -> (64, block_b).
    # Batch moves onto the lane axis here and stays there for the rest of the kernel.
    h = jax.lax.dot_general(
        w1_ref[...], x, (((1,), (1,)), ((), ())),
        preferred_element_type=jnp.float32)
    h = jnp.maximum(h + b1_ref[...], 0.0)        # relu(fc1); (64,1) bias lane-broadcast
    # dropout (eval mode) -> identity

    # fc2: (32, 64) @ (64, block_b) -> (32, block_b)   (f32 MXU; plenty of slack)
    h = jnp.dot(w2_ref[...], h, preferred_element_type=jnp.float32)
    h = jnp.maximum(h + b2_ref[...], 0.0)        # relu(fc2)
    # dropout (eval mode) -> identity

    # fc3: (16, 32) @ (32, block_b) -> (16, block_b)
    h = jnp.dot(w3_ref[...], h, preferred_element_type=jnp.float32)
    h = jnp.maximum(h + b3_ref[...], 0.0)        # relu(fc3)

    # out layer (16 -> 1): VPU multiply + sublane reduce -> lane-dense (1, block_b) row.
    z = jnp.sum(h * w4_ref[...], axis=0, keepdims=True) + b4_ref[...]
    # sigmoid via EUP exp + approximate EUP reciprocal (overflow-safe at both extremes).
    o_ref[...] = pl.reciprocal(1.0 + jnp.exp(-z), approx=True).astype(o_ref.dtype)


def ddos_classifier_forward(x, params, *, block_b=None):
    """x: (B, D) float32. params: PyTorch-layout weights (out,in) / biases (out,).
    Returns (B, 1) float32 probabilities (eval-mode forward)."""
    B, D = x.shape

    if block_b is None:
        block_b = _choose_block_b(B, D)
    assert block_b % 128 == 0, "block_b must be a multiple of 128 (lane-dense output)"
    nb = pl.cdiv(B, block_b)

    # All operands stay f32; weights are tiny and grid-invariant.
    w1 = params["w1"]                             # (64, D)
    w2 = params["w2"]                             # (32, 64)
    w3 = params["w3"]                             # (16, 32)
    w4 = params["w4"].T                           # (16, 1)  -- VPU final layer
    b1 = params["b1"].reshape(-1, 1)              # (64, 1)
    b2 = params["b2"].reshape(-1, 1)              # (32, 1)
    b3 = params["b3"].reshape(-1, 1)              # (16, 1)
    b4 = params["b4"].reshape(1, 1)               # (1, 1)

    # Explicit VMEM budget: double-buffered f32 x tile dominates; add live
    # intermediates, (double-buffered) weights, output buffers, and headroom.
    x_bytes = 2 * block_b * D * 4
    act_bytes = block_b * (64 + 32 + 16 + 4) * 4
    w_bytes = 2 * 4 * sum(int(a.size) for a in (w1, b1, w2, b2, w3, b3, w4, b4))
    vmem_limit = int(1.5 * (x_bytes + act_bytes + w_bytes)) + (4 << 20)
    vmem_limit = max(16 << 20, min(vmem_limit, 48 << 20))

    def const_spec(arr):
        # Constant block index -> fetched once, never re-DMA'd across grid steps.
        return pl.BlockSpec(arr.shape, lambda i: (0, 0))

    out = pl.pallas_call(
        _mlp_kernel,
        out_shape=jax.ShapeDtypeStruct((1, B), jnp.float32),
        grid_spec=pltpu.PrefetchScalarGridSpec(
            num_scalar_prefetch=0,
            grid=(nb,),
            in_specs=[
                pl.BlockSpec((block_b, D), lambda i: (i, 0)),   # x tile over batch
                const_spec(w1), const_spec(b1),
                const_spec(w2), const_spec(b2),
                const_spec(w3), const_spec(b3),
                const_spec(w4), const_spec(b4),
            ],
            # Lane-major output: each grid step writes one dense (1, block_b) strip.
            out_specs=pl.BlockSpec((1, block_b), lambda i: (0, i)),
        ),
        compiler_params=pltpu.CompilerParams(
            dimension_semantics=("parallel",),      # shard batch tiles across TCs (v7x)
            vmem_limit_bytes=vmem_limit,
        ),
    )(x, w1, b1, w2, b2, w3, b3, w4, b4)

    return out.reshape(B, 1)


def init_params(key, input_dim):
    """nn.Linear-style init; weights stored (out_features, in_features), biases (out_features,)."""
    dims = [(input_dim, 64), (64, 32), (32, 16), (16, 1)]
    params = {}
    for idx, (fan_in, fan_out) in enumerate(dims, start=1):
        key, kw, kb = jax.random.split(key, 3)
        bound = 1.0 / jnp.sqrt(fan_in)
        params[f"w{idx}"] = jax.random.uniform(kw, (fan_out, fan_in), jnp.float32, -bound, bound)
        params[f"b{idx}"] = jax.random.uniform(kb, (fan_out,), jnp.float32, -bound, bound)
    return params


def reference_forward(x, params):
    """Pure-JAX f32 reference of DDoSClassifier.forward (eval mode)."""
    h = jnp.maximum(x @ params["w1"].T + params["b1"], 0.0)
    h = jnp.maximum(h @ params["w2"].T + params["b2"], 0.0)
    h = jnp.maximum(h @ params["w3"].T + params["b3"], 0.0)
    return jax.nn.sigmoid(h @ params["w4"].T + params["b4"])


if __name__ == "__main__":
    key = jax.random.PRNGKey(0)
    batch, input_dim = 300, 32          # non-multiple of 128: exercises the partial last block

    k_x, k_p = jax.random.split(key)
    x = jax.random.normal(k_x, (batch, input_dim), jnp.float32)
    params = init_params(k_p, input_dim)

    out = ddos_classifier_forward(x, params)
    out = jax.block_until_ready(out)

    ref = reference_forward(x, params)
    assert out.shape == (batch, 1), out.shape
    max_err = float(jnp.max(jnp.abs(out - ref)))
    assert max_err < 5e-3, max_err      # f32 matmuls; approx EUP reciprocal in sigmoid

    print("KERNEL_OK")
</pallas_src>

<mosaic_0001>
module attributes {stable_mosaic.version = 11 : i64} {
  func.func @_mlp_kernel(%arg0: i32, %arg1: memref<128x32xf32, #tpu.memory_space<vmem>>, %arg2: memref<64x32xf32, #tpu.memory_space<vmem>>, %arg3: memref<64x1xf32, #tpu.memory_space<vmem>>, %arg4: memref<32x64xf32, #tpu.memory_space<vmem>>, %arg5: memref<32x1xf32, #tpu.memory_space<vmem>>, %arg6: memref<16x32xf32, #tpu.memory_space<vmem>>, %arg7: memref<16x1xf32, #tpu.memory_space<vmem>>, %arg8: memref<16x1xf32, #tpu.memory_space<vmem>>, %arg9: memref<1x1xf32, #tpu.memory_space<vmem>>, %arg10: memref<1x128xf32, #tpu.memory_space<vmem>>) attributes {dimension_semantics = [#tpu.dimension_semantics<parallel>], iteration_bounds = array<i64: 3>, scalar_prefetch = 0 : i64, scratch_operands = 0 : i64, tpu.core_type = #tpu.core_type<tc>, window_params = [{transform_indices = @transform_0, window_bounds = array<i64: 128, 32>}, {pipeline_mode = #tpu.pipeline_mode<synchronous>, transform_indices = @transform_1, window_bounds = array<i64: 64, 32>}, {pipeline_mode = #tpu.pipeline_mode<synchronous>, transform_indices = @transform_2, window_bounds = array<i64: 64, 1>}, {pipeline_mode = #tpu.pipeline_mode<synchronous>, transform_indices = @transform_3, window_bounds = array<i64: 32, 64>}, {pipeline_mode = #tpu.pipeline_mode<synchronous>, transform_indices = @transform_4, window_bounds = array<i64: 32, 1>}, {pipeline_mode = #tpu.pipeline_mode<synchronous>, transform_indices = @transform_5, window_bounds = array<i64: 16, 32>}, {pipeline_mode = #tpu.pipeline_mode<synchronous>, transform_indices = @transform_6, window_bounds = array<i64: 16, 1>}, {pipeline_mode = #tpu.pipeline_mode<synchronous>, transform_indices = @transform_7, window_bounds = array<i64: 16, 1>}, {pipeline_mode = #tpu.pipeline_mode<synchronous>, transform_indices = @transform_8, window_bounds = array<i64: 1, 1>}, {transform_indices = @transform_9, window_bounds = array<i64: 1, 128>}]} {
    %c0 = arith.constant 0 : index
    %c0_0 = arith.constant 0 : index
    %0 = vector.load %arg1[%c0, %c0_0] : memref<128x32xf32, #tpu.memory_space<vmem>>, vector<128x32xf32>
    %c0_1 = arith.constant 0 : index
    %c0_2 = arith.constant 0 : index
    %1 = vector.load %arg2[%c0_1, %c0_2] : memref<64x32xf32, #tpu.memory_space<vmem>>, vector<64x32xf32>
    %cst = arith.constant dense<0.000000e+00> : vector<64x128xf32>
    %2 = tpu.matmul %1, %0, %cst {dimension_numbers = #tpu.dot_dimension_numbers<[1], [1], [0], [0], [0, 0, 1, 0], [], []>} : vector<64x32xf32>, vector<128x32xf32>, vector<64x128xf32> -> vector<64x128xf32>
    %c0_3 = arith.constant 0 : index
    %c0_4 = arith.constant 0 : index
    %3 = vector.load %arg3[%c0_3, %c0_4] : memref<64x1xf32, #tpu.memory_space<vmem>>, vector<64x1xf32>
    %4 = vector.broadcast %3 : vector<64x1xf32> to vector<64x128xf32>
    %5 = arith.addf %2, %4 : vector<64x128xf32>
    %cst_5 = arith.constant 0.000000e+00 : f32
    %6 = vector.broadcast %cst_5 : f32 to vector<64x128xf32>
    %7 = arith.maximumf %5, %6 : vector<64x128xf32>
    %c0_6 = arith.constant 0 : index
    %c0_7 = arith.constant 0 : index
    %8 = vector.load %arg4[%c0_6, %c0_7] : memref<32x64xf32, #tpu.memory_space<vmem>>, vector<32x64xf32>
    %cst_8 = arith.constant dense<0.000000e+00> : vector<32x128xf32>
    %9 = tpu.matmul %8, %7, %cst_8 {dimension_numbers = #tpu.dot_dimension_numbers<[1], [0], [0], [1], [0, 0, 1, 1], [], []>} : vector<32x64xf32>, vector<64x128xf32>, vector<32x128xf32> -> vector<32x128xf32>
    %c0_9 = arith.constant 0 : index
    %c0_10 = arith.constant 0 : index
    %10 = vector.load %arg5[%c0_9, %c0_10] : memref<32x1xf32, #tpu.memory_space<vmem>>, vector<32x1xf32>
    %11 = vector.broadcast %10 : vector<32x1xf32> to vector<32x128xf32>
    %12 = arith.addf %9, %11 : vector<32x128xf32>
    %cst_11 = arith.constant 0.000000e+00 : f32
    %13 = vector.broadcast %cst_11 : f32 to vector<32x128xf32>
    %14 = arith.maximumf %12, %13 : vector<32x128xf32>
    %c0_12 = arith.constant 0 : index
    %c0_13 = arith.constant 0 : index
    %15 = vector.load %arg6[%c0_12, %c0_13] : memref<16x32xf32, #tpu.memory_space<vmem>>, vector<16x32xf32>
    %cst_14 = arith.constant dense<0.000000e+00> : vector<16x128xf32>
    %16 = tpu.matmul %15, %14, %cst_14 {dimension_numbers = #tpu.dot_dimension_numbers<[1], [0], [0], [1], [0, 0, 1, 1], [], []>} : vector<16x32xf32>, vector<32x128xf32>, vector<16x128xf32> -> vector<16x128xf32>
    %c0_15 = arith.constant 0 : index
    %c0_16 = arith.constant 0 : index
    %17 = vector.load %arg7[%c0_15, %c0_16] : memref<16x1xf32, #tpu.memory_space<vmem>>, vector<16x1xf32>
    %18 = vector.broadcast %17 : vector<16x1xf32> to vector<16x128xf32>
    %19 = arith.addf %16, %18 : vector<16x128xf32>
    %cst_17 = arith.constant 0.000000e+00 : f32
    %20 = vector.broadcast %cst_17 : f32 to vector<16x128xf32>
    %21 = arith.maximumf %19, %20 : vector<16x128xf32>
    %c0_18 = arith.constant 0 : index
    %c0_19 = arith.constant 0 : index
    %22 = vector.load %arg8[%c0_18, %c0_19] : memref<16x1xf32, #tpu.memory_space<vmem>>, vector<16x1xf32>
    %23 = vector.broadcast %22 : vector<16x1xf32> to vector<16x128xf32>
    %24 = arith.mulf %21, %23 : vector<16x128xf32>
    %cst_20 = arith.constant dense<0.000000e+00> : vector<128xf32>
    %25 = vector.multi_reduction <add>, %24, %cst_20 [0] : vector<16x128xf32> to vector<128xf32>
    %26 = vector.shape_cast %25 : vector<128xf32> to vector<1x128xf32>
    %c0_21 = arith.constant 0 : index
    %c0_22 = arith.constant 0 : index
    %27 = vector.load %arg9[%c0_21, %c0_22] : memref<1x1xf32, #tpu.memory_space<vmem>>, vector<1x1xf32>
    %28 = vector.broadcast %27 : vector<1x1xf32> to vector<1x128xf32>
    %29 = arith.addf %26, %28 : vector<1x128xf32>
    %cst_23 = arith.constant 0.000000e+00 : f32
    %30 = vector.broadcast %cst_23 : f32 to vector<1x128xf32>
    %31 = arith.subf %30, %29 : vector<1x128xf32>
    %32 = math.exp %31 : vector<1x128xf32>
    %cst_24 = arith.constant 1.000000e+00 : f32
    %33 = vector.broadcast %cst_24 : f32 to vector<1x128xf32>
    %34 = arith.addf %33, %32 : vector<1x128xf32>
    %35 = tpu.reciprocal %34 {approx = true} : vector<1x128xf32> -> vector<1x128xf32>
    %c0_25 = arith.constant 0 : index
    %c0_26 = arith.constant 0 : index
    %36 = vector.load %arg10[%c0_25, %c0_26] : memref<1x128xf32, #tpu.memory_space<vmem>>, vector<1x128xf32>
    tpu.vector_store %arg10[%c0_25, %c0_26], %35 {strides = array<i32>} : memref<1x128xf32, #tpu.memory_space<vmem>>, vector<1x128xf32>,
    return
  }
  func.func @transform_0(%arg0: i32) -> (i32, i32) {
    %c0_i32 = arith.constant 0 : i32
    %c0_i32_0 = arith.constant 0 : i32
    return %arg0, %c0_i32 : i32, i32
  }
  func.func @transform_1(%arg0: i32) -> (i32, i32) {
    %c0_i32 = arith.constant 0 : i32
    %c0_i32_0 = arith.constant 0 : i32
    %c0_i32_1 = arith.constant 0 : i32
    return %c0_i32, %c0_i32_0 : i32, i32
  }
  func.func @transform_2(%arg0: i32) -> (i32, i32) {
    %c0_i32 = arith.constant 0 : i32
    %c0_i32_0 = arith.constant 0 : i32
    %c0_i32_1 = arith.constant 0 : i32
    return %c0_i32, %c0_i32_0 : i32, i32
  }
  func.func @transform_3(%arg0: i32) -> (i32, i32) {
    %c0_i32 = arith.constant 0 : i32
    %c0_i32_0 = arith.constant 0 : i32
    %c0_i32_1 = arith.constant 0 : i32
    return %c0_i32, %c0_i32_0 : i32, i32
  }
  func.func @transform_4(%arg0: i32) -> (i32, i32) {
    %c0_i32 = arith.constant 0 : i32
    %c0_i32_0 = arith.constant 0 : i32
    %c0_i32_1 = arith.constant 0 : i32
    return %c0_i32, %c0_i32_0 : i32, i32
  }
  func.func @transform_5(%arg0: i32) -> (i32, i32) {
    %c0_i32 = arith.constant 0 : i32
    %c0_i32_0 = arith.constant 0 : i32
    %c0_i32_1 = arith.constant 0 : i32
    return %c0_i32, %c0_i32_0 : i32, i32
  }
  func.func @transform_6(%arg0: i32) -> (i32, i32) {
    %c0_i32 = arith.constant 0 : i32
    %c0_i32_0 = arith.constant 0 : i32
    %c0_i32_1 = arith.constant 0 : i32
    return %c0_i32, %c0_i32_0 : i32, i32
  }
  func.func @transform_7(%arg0: i32) -> (i32, i32) {
    %c0_i32 = arith.constant 0 : i32
    %c0_i32_0 = arith.constant 0 : i32
    %c0_i32_1 = arith.constant 0 : i32
    return %c0_i32, %c0_i32_0 : i32, i32
  }
  func.func @transform_8(%arg0: i32) -> (i32, i32) {
    %c0_i32 = arith.constant 0 : i32
    %c0_i32_0 = arith.constant 0 : i32
    %c0_i32_1 = arith.constant 0 : i32
    return %c0_i32, %c0_i32_0 : i32, i32
  }
  func.func @transform_9(%arg0: i32) -> (i32, i32) {
    %c0_i32 = arith.constant 0 : i32
    %c0_i32_0 = arith.constant 0 : i32
    return %c0_i32, %arg0 : i32, i32
  }
}

</mosaic_0001>

<llo_original>
// kernel: tpu_custom_call.1
$region0: #{tpu_custom_call.1}
  #allocation0 [shape = 'u32[]', space=smem, size = 0x4, offset = 0x4, fixed_abs, tag = 'smem constant byte address 0x4 - core index']
  #allocation1 [shape = 'u32[72,128]{1,0:T(1,128)}', space=vmem, size = 0x9000, scoped, tag = 'internal scratch']
  #allocation2 [shape = 'f32[1,1]{1,0:T(1,128)S(1)}', space=vmem, size = 0x200, scoped, tag = 'scoped memory for tpu_custom_call.1']
  %s0 = inlined_call_operand.vmem [shape: f32[300,32], index: 0, kind: input, shape index: {}]
  %s1 = inlined_call_operand.vmem [shape: f32[64,32], index: 1, kind: input, shape index: {}]
  %s2 = inlined_call_operand.vmem [shape: f32[64,1], index: 2, kind: input, shape index: {}]
  %s3 = inlined_call_operand.vmem [shape: f32[32,64], index: 3, kind: input, shape index: {}]
  %s4 = inlined_call_operand.vmem [shape: f32[32,1], index: 4, kind: input, shape index: {}]
  %s5 = inlined_call_operand.vmem [shape: f32[16,32], index: 5, kind: input, shape index: {}]
  %s6 = inlined_call_operand.vmem [shape: f32[16,1], index: 6, kind: input, shape index: {}]
  %s7 = inlined_call_operand.vmem [shape: f32[16,1], index: 7, kind: input, shape index: {}]
  %s8 = inlined_call_operand.<no memory space> [shape: f32[1,1], index: 8, kind: input, shape index: {}]
  %s9 = inlined_call_operand.hbm [shape: f32[1,300], index: 9, kind: output, shape index: {}]
  %s10 = sld [smem:[#allocation0]]
  $region69: #{tpu_custom_call.1} parent=0
    _
  %s12 = ssub.s32 1, %s10
  %s13 = scalar_select 0, %s12, %s10
  %v14 = vstv %s8
  %15 = vst [vmem:[#allocation2] sm:$0x1] %v14
  $region1: #{tpu_custom_call.1} parent=0
    #allocation3 [shape = 'u8[1024]{0}', space=vmem, size = 0x400, scoped, tag = 'output window, operand 0']
    #allocation4 [shape = 's32[2]{0}', space=sflag, size = 0x8, scoped, tag = 'scoped memory for tpu_custom_call.1']
    %16 = vsyncpa [#allocation4], 0
    %s17 = scalar_lea.sflag [#allocation4], 1
    %18 = vsyncpa %s17, 0
    loop: start=0, step=1, limit=5
    $region2: #{tpu_custom_call.1} parent=1 // loop_pre_header
      _
    $region3: #{tpu_custom_call.1} parent=1 // loop_header
      %s20 = sphi 0, %s24
      %p21 = scmp.ge.s32.totalorder %s20, 5
      %s30 = sphi 0, %s32
      %s33 = sphi 0, %s30
      %s34 = sphi 0, %s33
      %s50 = sphi 0, %s34
      %s54 = sphi 0, %s54
      %s56 = sphi 0, %s54
      %s57 = sphi 0, %s56
      %s71 = sphi 0, %s57
      %s75 = sphi 0, %s75
      %s77 = sphi 0, %s75
      %s78 = sphi 0, %s77
      %s92 = sphi 0, %s78
      %s96 = sphi 0, %s96
      %s98 = sphi 0, %s96
      %s99 = sphi 0, %s98
      %s113 = sphi 0, %s99
      %s117 = sphi 0, %s117
      %s119 = sphi 0, %s117
      %s120 = sphi 0, %s119
      %s134 = sphi 0, %s120
      %s138 = sphi 0, %s138
      %s140 = sphi 0, %s138
      %s141 = sphi 0, %s140
      %s155 = sphi 0, %s141
      %s159 = sphi 0, %s159
      %s161 = sphi 0, %s159
      %s162 = sphi 0, %s161
      %s176 = sphi 0, %s162
      %s180 = sphi 0, %s180
      %s182 = sphi 0, %s180
      %s183 = sphi 0, %s182
      %s197 = sphi 0, %s183
      %s201 = sphi 0, %s201
      %s203 = sphi 0, %s201
      %s204 = sphi 0, %s203
      %s218 = sphi 0, %s204
      %s224 = sphi 0, %s226
      %s227 = sphi 0, %s224
      %s228 = sphi 0, %s227
      %s244 = sphi 0, %s228
    $region4: #{tpu_custom_call.1} parent=1 // loop_header_branch
      %23 = sbr.rel (%p21) target = $region8
    $region5: #{tpu_custom_call.1} parent=1 // loop_body
      %s25 = ssub.s32 %s20, 1
      %s26 = ssub.s32 %s20, 2
      %s27 = sadd.s32 %s20, 1
      %s28 = ssub.s32 %s20, %s27
      %p29 = scmp.eq.s32.totalorder %s28, 0
      %s31 = sadd.s32 %s30, 1
      %s32 = scalar_select %p29, %s30, %s31
      %p35 = pneg %p29
      %p36 = scmp.eq.s32.totalorder %s20, 2
      %p37 = por %p35, %p36
      %p38 = scmp.ne.s32.totalorder %s30, %s33
      %p39 = scmp.eq.s32.totalorder %s20, 0
      %p40 = por %p38, %p39
      %p41 = scmp.ne.s32.totalorder %s30, %s33
      %p42 = scmp.eq.s32.totalorder %s25, 2
      %p43 = por %p41, %p42
      %p44 = scmp.ne.s32.totalorder %s33, %s34
      %p45 = scmp.eq.s32.totalorder %s25, 0
      %p46 = por %p44, %p45
      %p47 = scmp.ne.s32.totalorder %s33, %s34
      %p48 = scmp.eq.s32.totalorder %s26, 2
      %p49 = por %p47, %p48
      %p51 = scmp.ne.s32.totalorder %s34, %s50
      %p52 = scmp.eq.s32.totalorder %s26, 0
      %p53 = por %p51, %p52
      %s55 = sadd.s32 %s54, 1
      %p58 = scmp.eq.s32.totalorder %s20, 2
      %p59 = scmp.ne.s32.totalorder %s54, %s56
      %p60 = scmp.eq.s32.totalorder %s20, 0
      %p61 = por %p59, %p60
      %p62 = scmp.ne.s32.totalorder %s54, %s56
      %p63 = scmp.eq.s32.totalorder %s25, 2
      %p64 = por %p62, %p63
      %p65 = scmp.ne.s32.totalorder %s56, %s57
      %p66 = scmp.eq.s32.totalorder %s25, 0
      %p67 = por %p65, %p66
      %p68 = scmp.ne.s32.totalorder %s56, %s57
      %p69 = scmp.eq.s32.totalorder %s26, 2
      %p70 = por %p68, %p69
      %p72 = scmp.ne.s32.totalorder %s57, %s71
      %p73 = scmp.eq.s32.totalorder %s26, 0
      %p74 = por %p72, %p73
      %s76 = sadd.s32 %s75, 1
      %p79 = scmp.eq.s32.totalorder %s20, 2
      %p80 = scmp.ne.s32.totalorder %s75, %s77
      %p81 = scmp.eq.s32.totalorder %s20, 0
      %p82 = por %p80, %p81
      %p83 = scmp.ne.s32.totalorder %s75, %s77
      %p84 = scmp.eq.s32.totalorder %s25, 2
      %p85 = por %p83, %p84
      %p86 = scmp.ne.s32.totalorder %s77, %s78
      %p87 = scmp.eq.s32.totalorder %s25, 0
      %p88 = por %p86, %p87
      %p89 = scmp.ne.s32.totalorder %s77, %s78
      %p90 = scmp.eq.s32.totalorder %s26, 2
      %p91 = por %p89, %p90
      %p93 = scmp.ne.s32.totalorder %s78, %s92
      %p94 = scmp.eq.s32.totalorder %s26, 0
      %p95 = por %p93, %p94
      %s97 = sadd.s32 %s96, 1
      %p100 = scmp.eq.s32.totalorder %s20, 2
      %p101 = scmp.ne.s32.totalorder %s96, %s98
      %p102 = scmp.eq.s32.totalorder %s20, 0
      %p103 = por %p101, %p102
      %p104 = scmp.ne.s32.totalorder %s96, %s98
      %p105 = scmp.eq.s32.totalorder %s25, 2
      %p106 = por %p104, %p105
      %p107 = scmp.ne.s32.totalorder %s98, %s99
      %p108 = scmp.eq.s32.totalorder %s25, 0
      %p109 = por %p107, %p108
      %p110 = scmp.ne.s32.totalorder %s98, %s99
      %p111 = scmp.eq.s32.totalorder %s26, 2
      %p112 = por %p110, %p111
      %p114 = scmp.ne.s32.totalorder %s99, %s113
      %p115 = scmp.eq.s32.totalorder %s26, 0
      %p116 = por %p114, %p115
      %s118 = sadd.s32 %s117, 1
      %p121 = scmp.eq.s32.totalorder %s20, 2
      %p122 = scmp.ne.s32.totalorder %s117, %s119
      %p123 = scmp.eq.s32.totalorder %s20, 0
      %p124 = por %p122, %p123
      %p125 = scmp.ne.s32.totalorder %s117, %s119
      %p126 = scmp.eq.s32.totalorder %s25, 2
      %p127 = por %p125, %p126
      %p128 = scmp.ne.s32.totalorder %s119, %s120
      %p129 = scmp.eq.s32.totalorder %s25, 0
      %p130 = por %p128, %p129
      %p131 = scmp.ne.s32.totalorder %s119, %s120
      %p132 = scmp.eq.s32.totalorder %s26, 2
      %p133 = por %p131, %p132
      %p135 = scmp.ne.s32.totalorder %s120, %s134
      %p136 = scmp.eq.s32.totalorder %s26, 0
      %p137 = por %p135, %p136
      %s139 = sadd.s32 %s138, 1
      %p142 = scmp.eq.s32.totalorder %s20, 2
      %p143 = scmp.ne.s32.totalorder %s138, %s140
      %p144 = scmp.eq.s32.totalorder %s20, 0
      %p145 = por %p143, %p144
      %p146 = scmp.ne.s32.totalorder %s138, %s140
      %p147 = scmp.eq.s32.totalorder %s25, 2
      %p148 = por %p146, %p147
      %p149 = scmp.ne.s32.totalorder %s140, %s141
      %p150 = scmp.eq.s32.totalorder %s25, 0
      %p151 = por %p149, %p150
      %p152 = scmp.ne.s32.totalorder %s140, %s141
      %p153 = scmp.eq.s32.totalorder %s26, 2
      %p154 = por %p152, %p153
      %p156 = scmp.ne.s32.totalorder %s141, %s155
      %p157 = scmp.eq.s32.totalorder %s26, 0
      %p158 = por %p156, %p157
      %s160 = sadd.s32 %s159, 1
      %p163 = scmp.eq.s32.totalorder %s20, 2
      %p164 = scmp.ne.s32.totalorder %s159, %s161
      %p165 = scmp.eq.s32.totalorder %s20, 0
      %p166 = por %p164, %p165
      %p167 = scmp.ne.s32.totalorder %s159, %s161
      %p168 = scmp.eq.s32.totalorder %s25, 2
      %p169 = por %p167, %p168
      %p170 = scmp.ne.s32.totalorder %s161, %s162
      %p171 = scmp.eq.s32.totalorder %s25, 0
      %p172 = por %p170, %p171
      %p173 = scmp.ne.s32.totalorder %s161, %s162
      %p174 = scmp.eq.s32.totalorder %s26, 2
      %p175 = por %p173, %p174
      %p177 = scmp.ne.s32.totalorder %s162, %s176
      %p178 = scmp.eq.s32.totalorder %s26, 0
      %p179 = por %p177, %p178
      %s181 = sadd.s32 %s180, 1
      %p184 = scmp.eq.s32.totalorder %s20, 2
      %p185 = scmp.ne.s32.totalorder %s180, %s182
      %p186 = scmp.eq.s32.totalorder %s20, 0
      %p187 = por %p185, %p186
      %p188 = scmp.ne.s32.totalorder %s180, %s182
      %p189 = scmp.eq.s32.totalorder %s25, 2
      %p190 = por %p188, %p189
      %p191 = scmp.ne.s32.totalorder %s182, %s183
      %p192 = scmp.eq.s32.totalorder %s25, 0
      %p193 = por %p191, %p192
      %p194 = scmp.ne.s32.totalorder %s182, %s183
      %p195 = scmp.eq.s32.totalorder %s26, 2
      %p196 = por %p194, %p195
      %p198 = scmp.ne.s32.totalorder %s183, %s197
      %p199 = scmp.eq.s32.totalorder %s26, 0
      %p200 = por %p198, %p199
      %s202 = sadd.s32 %s201, 1
      %p205 = scmp.eq.s32.totalorder %s20, 2
      %p206 = scmp.ne.s32.totalorder %s201, %s203
      %p207 = scmp.eq.s32.totalorder %s20, 0
      %p208 = por %p206, %p207
      %p209 = scmp.ne.s32.totalorder %s201, %s203
      %p210 = scmp.eq.s32.totalorder %s25, 2
      %p211 = por %p209, %p210
      %p212 = scmp.ne.s32.totalorder %s203, %s204
      %p213 = scmp.eq.s32.totalorder %s25, 0
      %p214 = por %p212, %p213
      %p215 = scmp.ne.s32.totalorder %s203, %s204
      %p216 = scmp.eq.s32.totalorder %s26, 2
      %p217 = por %p215, %p216
      %p219 = scmp.ne.s32.totalorder %s204, %s218
      %p220 = scmp.eq.s32.totalorder %s26, 0
      %p221 = por %p219, %p220
      %s222 = ssub.s32 %s20, %s27
      %p223 = scmp.eq.s32.totalorder %s222, 0
      %s225 = sadd.s32 %s224, 1
      %s226 = scalar_select %p223, %s224, %s225
      %p229 = pneg %p223
      %p230 = scmp.eq.s32.totalorder %s20, 2
      %p231 = por %p229, %p230
      %p232 = scmp.ne.s32.totalorder %s224, %s227
      %p233 = scmp.eq.s32.totalorder %s20, 0
      %p234 = por %p232, %p233
      %p235 = scmp.ne.s32.totalorder %s224, %s227
      %p236 = scmp.eq.s32.totalorder %s25, 2
      %p237 = por %p235, %p236
      %p238 = scmp.ne.s32.totalorder %s227, %s228
      %p239 = scmp.eq.s32.totalorder %s25, 0
      %p240 = por %p238, %p239
      %p241 = scmp.ne.s32.totalorder %s227, %s228
      %p242 = scmp.eq.s32.totalorder %s26, 2
      %p243 = por %p241, %p242
      %p245 = scmp.ne.s32.totalorder %s228, %s244
      %p246 = scmp.eq.s32.totalorder %s26, 0
      %p247 = por %p245, %p246
      %p248 = scmp.le.s32.totalorder 1, %s20
      %p249 = scmp.lt.s32.totalorder %s20, 4
      %p250 = pnand %p248, %p249
      %p251 = pneg %p250
      // Predicated region
      $region9: #{tpu_custom_call.1} parent=5 // pred_check
        _
      $region10: #{tpu_custom_call.1} parent=5 // pred_check_branch
        %253 = sbr.rel (%p250) target = $region12
      $region11: #{tpu_custom_call.1} parent=5 // pred_region
        %s254 = ssub.s32 %s20, 1
        // Predicated region
        $region13: #{tpu_custom_call.1} parent=11 // pred_check
          %p255 = pneg %p67
        $region14: #{tpu_custom_call.1} parent=11 // pred_check_branch
          %257 = sbr.rel (%p255) target = $region16
        $region15: #{tpu_custom_call.1} parent=11 // pred_region
          _
        $region16: #{tpu_custom_call.1} parent=11 // pred_fallthru
          _
        // Predicated region
        $region17: #{tpu_custom_call.1} parent=11 // pred_check
          %p258 = pneg %p88
        $region18: #{tpu_custom_call.1} parent=11 // pred_check_branch
          %260 = sbr.rel (%p258) target = $region20
        $region19: #{tpu_custom_call.1} parent=11 // pred_region
          _
        $region20: #{tpu_custom_call.1} parent=11 // pred_fallthru
          _
        // Predicated region
        $region21: #{tpu_custom_call.1} parent=11 // pred_check
          %p261 = pneg %p109
        $region22: #{tpu_custom_call.1} parent=11 // pred_check_branch
          %263 = sbr.rel (%p261) target = $region24
        $region23: #{tpu_custom_call.1} parent=11 // pred_region
          _
        $region24: #{tpu_custom_call.1} parent=11 // pred_fallthru
          _
        // Predicated region
        $region25: #{tpu_custom_call.1} parent=11 // pred_check
          %p264 = pneg %p130
        $region26: #{tpu_custom_call.1} parent=11 // pred_check_branch
          %266 = sbr.rel (%p264) target = $region28
        $region27: #{tpu_custom_call.1} parent=11 // pred_region
          _
        $region28: #{tpu_custom_call.1} parent=11 // pred_fallthru
          _
        // Predicated region
        $region29: #{tpu_custom_call.1} parent=11 // pred_check
          %p267 = pneg %p151
        $region30: #{tpu_custom_call.1} parent=11 // pred_check_branch
          %269 = sbr.rel (%p267) target = $region32
        $region31: #{tpu_custom_call.1} parent=11 // pred_region
          _
        $region32: #{tpu_custom_call.1} parent=11 // pred_fallthru
          _
        // Predicated region
        $region33: #{tpu_custom_call.1} parent=11 // pred_check
          %p270 = pneg %p172
        $region34: #{tpu_custom_call.1} parent=11 // pred_check_branch
          %272 = sbr.rel (%p270) target = $region36
        $region35: #{tpu_custom_call.1} parent=11 // pred_region
          _
        $region36: #{tpu_custom_call.1} parent=11 // pred_fallthru
          _
        // Predicated region
        $region37: #{tpu_custom_call.1} parent=11 // pred_check
          %p273 = pneg %p193
        $region38: #{tpu_custom_call.1} parent=11 // pred_check_branch
          %275 = sbr.rel (%p273) target = $region40
        $region39: #{tpu_custom_call.1} parent=11 // pred_region
          _
        $region40: #{tpu_custom_call.1} parent=11 // pred_fallthru
          _
        // Predicated region
        $region41: #{tpu_custom_call.1} parent=11 // pred_check
          %p276 = pneg %p214
        $region42: #{tpu_custom_call.1} parent=11 // pred_check_branch
          %278 = sbr.rel (%p276) target = $region44
        $region43: #{tpu_custom_call.1} parent=11 // pred_region
          _
        $region44: #{tpu_custom_call.1} parent=11 // pred_fallthru
          _
      $region12: #{tpu_custom_call.1} parent=5 // pred_fallthru
        _
      %p279 = scmp.lt.s32.totalorder %s20, 3
      // Predicated region
      $region45: #{tpu_custom_call.1} parent=5 // pred_check
        %p280 = pneg %p279
      $region46: #{tpu_custom_call.1} parent=5 // pred_check_branch
        %282 = sbr.rel (%p280) target = $region48
      $region47: #{tpu_custom_call.1} parent=5 // pred_region
        // Predicated region
        $region49: #{tpu_custom_call.1} parent=47 // pred_check
          %p283 = pneg %p40
        $region50: #{tpu_custom_call.1} parent=47 // pred_check_branch
          %285 = sbr.rel (%p283) target = $region52
        $region51: #{tpu_custom_call.1} parent=47 // pred_region
          %s286 = smul.u32 16, %s20
          %s287 = ssub.s32 38, %s286
          %p288 = scmp.lt.s32.totalorder %s287, 16
          %s289 = scalar_select %p288, %s287, 16
          %s290 = smul.u32 8, %s289
          %p291 = scmp.lt.s32.totalorder %s286, 37
          %s292 = scalar_select %p291, %s286, 37
          %s293 = smul.addr %s292, 8
          %s294 = scalar_lea.vmem %s0, %s293
          %s295 = smul.u32 16, %s20
          %s296 = ssub.s32 38, %s295
          %p297 = scmp.lt.s32.totalorder %s296, 16
          %s298 = scalar_select %p297, %s296, 16
          %s299 = smul.u32 8, %s298
        $region52: #{tpu_custom_call.1} parent=47 // pred_fallthru
          _
      $region48: #{tpu_custom_call.1} parent=5 // pred_fallthru
        _
      %p300 = scmp.le.s32.totalorder 1, %s20
      %p301 = scmp.lt.s32.totalorder %s20, 4
      %p302 = pnand %p300, %p301
      %p303 = pneg %p302
      // Predicated region
      $region53: #{tpu_custom_call.1} parent=5 // pred_check
        _
      $region54: #{tpu_custom_call.1} parent=5 // pred_check_branch
        %305 = sbr.rel (%p302) target = $region56
      $region55: #{tpu_custom_call.1} parent=5 // pred_region
        %s306 = ssub.s32 %s20, 1
        %s307 = smul.u32 16, %s25
        %s308 = ssub.s32 38, %s307
        %p309 = scmp.lt.s32.totalorder %s308, 16
        %s310 = scalar_select %p309, %s308, 16
        %s311 = smul.u32 8, %s310
        %p312 = scmp.lt.s32.totalorder %s307, 37
        %s313 = scalar_select %p312, %s307, 37
        %s314 = smul.addr %s313, 8
        %s315 = scalar_lea.vmem %s0, %s314
        %p316 = pneg %p46
        %p317 = pneg %p43
        %p318 = pneg %p67
        %p319 = pneg %p64
        %p320 = pneg %p88
        %p321 = pneg %p85
        %p322 = pneg %p109
        %p323 = pneg %p106
        %p324 = pneg %p130
        %p325 = pneg %p127
        %p326 = pneg %p151
        %p327 = pneg %p148
        %p328 = pneg %p172
        %p329 = pneg %p169
        %p330 = pneg %p193
        %p331 = pneg %p190
        %p332 = pneg %p214
        %p333 = pneg %p211
        %p334 = pneg %p240
        %p335 = pneg %p237
        %s336 = sand.u32 %s227, 1
        %s337 = scalar_lea.sflag [#allocation4], %s336
        %s338 = sand.u32 %s227, 1
        %s339 = scalar_lea.vmem [#allocation3], %s338
        %s340 = smul.u32 16, %s25
        %s341 = ssub.s32 38, %s340
        %p342 = scmp.lt.s32.totalorder %s341, 16
        %s343 = scalar_select %p342, %s341, 16
        %s344 = smul.u32 8, %s343
        %p345 = scmp.lt.s32.totalorder %s340, 37
        %s346 = scalar_select %p345, %s340, 37
        %s347 = smul.addr %s346, 8
        %s348 = scalar_lea.vmem %s0, %s347
        %s349 = smul.u32 16, %s25
        %s350 = ssub.s32 38, %s349
        %p351 = scmp.lt.s32.totalorder %s350, 16
        %s352 = scalar_select %p351, %s350, 16
        %s353 = smul.u32 8, %s352
        %v354 = vld [vmem:[%s348] sm:$0xff]
        %v355 = vld [vmem:[%s348 + $0x8] sm:$0xff]
        %v356 = vld [vmem:[%s348 + $0x10] sm:$0xff]
        %v357 = vld [vmem:[%s348 + $0x18] sm:$0xff]
        %v358 = vld [vmem:[%s348 + $0x20] sm:$0xff]
        %v359 = vld [vmem:[%s348 + $0x28] sm:$0xff]
        %v360 = vld [vmem:[%s348 + $0x30] sm:$0xff]
        %v361 = vld [vmem:[%s348 + $0x38] sm:$0xff]
        %v362 = vld [vmem:[%s348 + $0x40] sm:$0xff]
        %v363 = vld [vmem:[%s348 + $0x48] sm:$0xff]
        %v364 = vld [vmem:[%s348 + $0x50] sm:$0xff]
        %v365 = vld [vmem:[%s348 + $0x58] sm:$0xff]
        %v366 = vld [vmem:[%s348 + $0x60] sm:$0xff]
        %v367 = vld [vmem:[%s348 + $0x68] sm:$0xff]
        %v368 = vld [vmem:[%s348 + $0x70] sm:$0xff]
        %v369 = vld [vmem:[%s348 + $0x78] sm:$0xff]
        %v370 = vld [vmem:[%s1] sm:$0xff]
        %v371 = vld [vmem:[%s1 + $0x8] sm:$0xff]
        %v372 = vld [vmem:[%s1 + $0x10] sm:$0xff]
        %v373 = vld [vmem:[%s1 + $0x18] sm:$0xff]
        %v374 = vld [vmem:[%s1 + $0x20] sm:$0xff]
        %v375 = vld [vmem:[%s1 + $0x28] sm:$0xff]
        %v376 = vld [vmem:[%s1 + $0x30] sm:$0xff]
        %v377 = vld [vmem:[%s1 + $0x38] sm:$0xff]
        %v378 = vld [vmem:[%s2] sm:$0xff]
        %v379 = vld [vmem:[%s2 + $0x8] sm:$0xff]
        %v380 = vld [vmem:[%s2 + $0x10] sm:$0xff]
        %v381 = vld [vmem:[%s2 + $0x18] sm:$0xff]
        %v382 = vld [vmem:[%s2 + $0x20] sm:$0xff]
        %v383 = vld [vmem:[%s2 + $0x28] sm:$0xff]
        %v384 = vld [vmem:[%s2 + $0x30] sm:$0xff]
        %v385 = vld [vmem:[%s2 + $0x38] sm:$0xff]
        %387 = vset.pattern.permute.xlu0 0
        %388 = vperm.xlu0 %387, %v378
        %v389 = vpop.permute.xlu0 %388
        %392 = vset.pattern.permute.xlu0 0
        %393 = vperm.xlu0 %392, %v379
        %v394 = vpop.permute.xlu0 %393
        %397 = vset.pattern.permute.xlu0 0
        %398 = vperm.xlu0 %397, %v380
        %v399 = vpop.permute.xlu0 %398
        %402 = vset.pattern.permute.xlu0 0
        %403 = vperm.xlu0 %402, %v381
        %v404 = vpop.permute.xlu0 %403
        %407 = vset.pattern.permute.xlu0 0
        %408 = vperm.xlu0 %407, %v382
        %v409 = vpop.permute.xlu0 %408
        %412 = vset.pattern.permute.xlu0 0
        %413 = vperm.xlu0 %412, %v383
        %v414 = vpop.permute.xlu0 %413
        %417 = vset.pattern.permute.xlu0 0
        %418 = vperm.xlu0 %417, %v384
        %v419 = vpop.permute.xlu0 %418
        %422 = vset.pattern.permute.xlu0 0
        %423 = vperm.xlu0 %422, %v385
        %v424 = vpop.permute.xlu0 %423
        %vm426 = vcmask 261120
        %v428 = vsel %vm426, %v370, 0
        %v431 = vsel %vm426, %v371, 0
        %v434 = vsel %vm426, %v372, 0
        %v437 = vsel %vm426, %v373, 0
        %v440 = vsel %vm426, %v374, 0
        %v443 = vsel %vm426, %v375, 0
        %v446 = vsel %vm426, %v376, 0
        %v449 = vsel %vm426, %v377, 0
        %v452 = vsel %vm426, %v354, 0
        %v455 = vsel %vm426, %v355, 0
        %v458 = vsel %vm426, %v356, 0
        %v461 = vsel %vm426, %v357, 0
        %v464 = vsel %vm426, %v358, 0
        %v467 = vsel %vm426, %v359, 0
        %v470 = vsel %vm426, %v360, 0
        %v473 = vsel %vm426, %v361, 0
        %v476 = vsel %vm426, %v362, 0
        %v479 = vsel %vm426, %v363, 0
        %v482 = vsel %vm426, %v364, 0
        %v485 = vsel %vm426, %v365, 0
        %v488 = vsel %vm426, %v366, 0
        %v491 = vsel %vm426, %v367, 0
        %v494 = vsel %vm426, %v368, 0
        %v497 = vsel %vm426, %v369, 0
        %499 = vmatpush.xpose.msra.mxu0 %v497
        %500 = vmatpush.xpose.msra.mxu0 %v494
        %501 = vmatpush.xpose.msra.mxu0 %v491
        %502 = vmatpush.xpose.msra.mxu0 %v488
        %503 = vmatpush.xpose.msra.mxu0 %v485
        %504 = vmatpush.xpose.msra.mxu0 %v482
        %505 = vmatpush.xpose.msra.mxu0 %v479
        %506 = vmatpush.xpose.msra.mxu0 %v476
        %507 = vmatpush.xpose.msra.mxu0 %v473
        %508 = vmatpush.xpose.msra.mxu0 %v470
        %509 = vmatpush.xpose.msra.mxu0 %v467
        %510 = vmatpush.xpose.msra.mxu0 %v464
        %511 = vmatpush.xpose.msra.mxu0 %v461
        %512 = vmatpush.xpose.msra.mxu0 %v458
        %513 = vmatpush.xpose.msra.mxu0 %v455
        %514 = vmatpush.xpose.msra.mxu0 %v452
        %515 = vmatmul.f32.gmra.mxu0 %v428
        %v516 = vpop.f32.mrf.mxu0
        %v517 = vadd.f32 %v389, %v516
        %518 = vmatmul.f32.gmra.mxu0 %v431
        %v519 = vpop.f32.mrf.mxu0
        %v520 = vadd.f32 %v394, %v519
        %521 = vmatmul.f32.gmra.mxu0 %v434
        %v522 = vpop.f32.mrf.mxu0
        %v523 = vadd.f32 %v399, %v522
        %524 = vmatmul.f32.gmra.mxu0 %v437
        %v525 = vpop.f32.mrf.mxu0
        %v526 = vadd.f32 %v404, %v525
        %527 = vmatmul.f32.gmra.mxu0 %v440
        %v528 = vpop.f32.mrf.mxu0
        %v529 = vadd.f32 %v409, %v528
        %530 = vmatmul.f32.gmra.mxu0 %v443
        %v531 = vpop.f32.mrf.mxu0
        %v532 = vadd.f32 %v414, %v531
        %533 = vmatmul.f32.gmra.mxu0 %v446
        %v534 = vpop.f32.mrf.mxu0
        %v535 = vadd.f32 %v419, %v534
        %536 = vmatmul.f32.gmra.mxu0 %v449
        %v537 = vpop.f32.mrf.mxu0
        %v538 = vadd.f32 %v424, %v537
        %539 = vdwg.mxu0
        %v540 = vmax.f32 %v517, 0.0
        %v541 = vmax.f32 %v520, 0.0
        %v542 = vmax.f32 %v523, 0.0
        %v543 = vmax.f32 %v526, 0.0
        %v544 = vmax.f32 %v529, 0.0
        %v545 = vmax.f32 %v532, 0.0
        %v546 = vmax.f32 %v535, 0.0
        %v547 = vmax.f32 %v538, 0.0
        %v548 = vld [vmem:[%s3] sm:$0xff]
        %v549 = vld [vmem:[%s3 + $0x8] sm:$0xff]
        %v550 = vld [vmem:[%s3 + $0x10] sm:$0xff]
        %v551 = vld [vmem:[%s3 + $0x18] sm:$0xff]
        %v552 = vld [vmem:[%s4] sm:$0xff]
        %v553 = vld [vmem:[%s4 + $0x8] sm:$0xff]
        %v554 = vld [vmem:[%s4 + $0x10] sm:$0xff]
        %v555 = vld [vmem:[%s4 + $0x18] sm:$0xff]
        %557 = vset.pattern.permute.xlu0 0
        %558 = vperm.xlu0 %557, %v552
        %v559 = vpop.permute.xlu0 %558
        %562 = vset.pattern.permute.xlu0 0
        %563 = vperm.xlu0 %562, %v553
        %v564 = vpop.permute.xlu0 %563
        %567 = vset.pattern.permute.xlu0 0
        %568 = vperm.xlu0 %567, %v554
        %v569 = vpop.permute.xlu0 %568
        %572 = vset.pattern.permute.xlu0 0
        %573 = vperm.xlu0 %572, %v555
        %v574 = vpop.permute.xlu0 %573
        %vm576 = vcmask 523264
        %v578 = vsel %vm576, %v548, 0
        %v581 = vsel %vm576, %v549, 0
        %v584 = vsel %vm576, %v550, 0
        %v587 = vsel %vm576, %v551, 0
        %589 = vmatpush.msra.mxu0 0.0
        %590 = vmatpush.msra.mxu0 0.0
        %591 = vmatpush.msra.mxu0 0.0
        %592 = vmatpush.msra.mxu0 0.0
        %593 = vmatpush.msra.mxu0 0.0
        %594 = vmatpush.msra.mxu0 0.0
        %595 = vmatpush.msra.mxu0 0.0
        %596 = vmatpush.msra.mxu0 0.0
        %597 = vmatpush.msra.mxu0 %v547
        %598 = vmatpush.msra.mxu0 %v546
        %599 = vmatpush.msra.mxu0 %v545
        %600 = vmatpush.msra.mxu0 %v544
        %601 = vmatpush.msra.mxu0 %v543
        %602 = vmatpush.msra.mxu0 %v542
        %603 = vmatpush.msra.mxu0 %v541
        %604 = vmatpush.msra.mxu0 %v540
        %605 = vmatmul.f32.gmra.mxu0 %v578
        %v606 = vpop.f32.mrf.mxu0
        %v607 = vadd.f32 %v559, %v606
        %608 = vmatmul.f32.gmra.mxu0 %v581
        %v609 = vpop.f32.mrf.mxu0
        %v610 = vadd.f32 %v564, %v609
        %611 = vmatmul.f32.gmra.mxu0 %v584
        %v612 = vpop.f32.mrf.mxu0
        %v613 = vadd.f32 %v569, %v612
        %614 = vmatmul.f32.gmra.mxu0 %v587
        %v615 = vpop.f32.mrf.mxu0
        %v616 = vadd.f32 %v574, %v615
        %617 = vdwg.mxu0
        %v618 = vmax.f32 %v607, 0.0
        %v619 = vmax.f32 %v610, 0.0
        %v620 = vmax.f32 %v613, 0.0
        %v621 = vmax.f32 %v616, 0.0
        %v622 = vld [vmem:[%s5] sm:$0xff]
        %v623 = vld [vmem:[%s5 + $0x8] sm:$0xff]
        %v624 = vld [vmem:[%s6] sm:$0xff]
        %v625 = vld [vmem:[%s6 + $0x8] sm:$0xff]
        %627 = vset.pattern.permute.xlu0 0
        %628 = vperm.xlu0 %627, %v624
        %v629 = vpop.permute.xlu0 %628
        %632 = vset.pattern.permute.xlu0 0
        %633 = vperm.xlu0 %632, %v625
        %v634 = vpop.permute.xlu0 %633
        %v637 = vsel %vm426, %v622, 0
        %v640 = vsel %vm426, %v623, 0
        %642 = vmatpush.msra.mxu0 0.0
        %643 = vmatpush.msra.mxu0 0.0
        %644 = vmatpush.msra.mxu0 0.0
        %645 = vmatpush.msra.mxu0 0.0
        %646 = vmatpush.msra.mxu0 0.0
        %647 = vmatpush.msra.mxu0 0.0
        %648 = vmatpush.msra.mxu0 0.0
        %649 = vmatpush.msra.mxu0 0.0
        %650 = vmatpush.msra.mxu0 0.0
        %651 = vmatpush.msra.mxu0 0.0
        %652 = vmatpush.msra.mxu0 0.0
        %653 = vmatpush.msra.mxu0 0.0
        %654 = vmatpush.msra.mxu0 %v621
        %655 = vmatpush.msra.mxu0 %v620
        %656 = vmatpush.msra.mxu0 %v619
        %657 = vmatpush.msra.mxu0 %v618
        %658 = vmatmul.f32.gmra.mxu0 %v637
        %v659 = vpop.f32.mrf.mxu0
        %v660 = vadd.f32 %v629, %v659
        %661 = vmatmul.f32.gmra.mxu0 %v640
        %v662 = vpop.f32.mrf.mxu0
        %v663 = vadd.f32 %v634, %v662
        %664 = vdwg.mxu0
        %v665 = vmax.f32 %v660, 0.0
        %v666 = vmax.f32 %v663, 0.0
        %v667 = vld [vmem:[%s7] sm:$0xff]
        %v668 = vld [vmem:[%s7 + $0x8] sm:$0xff]
        %670 = vset.pattern.permute.xlu0 0
        %671 = vperm.xlu0 %670, %v667
        %v672 = vpop.permute.xlu0 %671
        %675 = vset.pattern.permute.xlu0 0
        %676 = vperm.xlu0 %675, %v668
        %v677 = vpop.permute.xlu0 %676
        %v679 = vmul.f32 %v665, %v672
        %v680 = vmul.f32 %v666, %v677
        %v681 = vadd.f32 %v679, %v680
        %v682 = vrot.slane %v681, 4
        %v683 = vadd.f32 %v681, %v682
        %v684 = vrot.slane %v683, 2
        %v685 = vadd.f32 %v683, %v684
        %v686 = vrot.slane %v685, 1
        %v687 = vadd.f32 %v685, %v686
        %v688 = vld [vmem:[#allocation2] sm:$0x1]
        %690 = vset.pattern.permute.xlu0 0
        %691 = vperm.xlu0 %690, %v688
        %v692 = vpop.permute.xlu0 %691
        %v694 = vperm.slane %v692, 0
        %v695 = vadd.f32 %v687, %v694
        %v696 = vsub.f32 0.0, %v695
        %v697 = vmul.f32 %v696, 1.442695
        %v698 = vpow.pop %v697
        %v699 = vadd.f32 %v698, 1.0
        %v700 = vrcp.pop %v699
        %701 = vst [vmem:[%s339] sm:$0x1] %v700
        %s702 = sand.u32 %s227, 1
        %s703 = scalar_lea.sflag [#allocation4], %s702
        %s704 = sand.u32 %s227, 1
        %s705 = scalar_lea.vmem [#allocation3], %s704
        // Predicated region
        $region57: #{tpu_custom_call.1} parent=55 // pred_check
          %p706 = pneg %p237
        $region58: #{tpu_custom_call.1} parent=55 // pred_check_branch
          %708 = sbr.rel (%p706) target = $region60
        $region59: #{tpu_custom_call.1} parent=55 // pred_region
          %710 = vsyncadd %s703, 0
          %s711 = scalar_lea.hbm %s9, %s25
          %s713 = sshll.u32 %s705, 4
          %s714 = int_to_ptr.vmem [resolvable:$true] %s713
          %s715 = sshll.u32 %s711, 4
          %s716 = int_to_ptr.hbm [resolvable:$true] %s715
          %718 = dma.vmem_to_hbm [thread:$0]  %s714, 16, %s716, %s703
        $region60: #{tpu_custom_call.1} parent=55 // pred_fallthru
          _
      $region56: #{tpu_custom_call.1} parent=5 // pred_fallthru
        _
      %p719 = scmp.le.s32.totalorder 2, %s20
      // Predicated region
      $region61: #{tpu_custom_call.1} parent=5 // pred_check
        %p720 = pneg %p719
      $region62: #{tpu_custom_call.1} parent=5 // pred_check_branch
        %722 = sbr.rel (%p720) target = $region64
      $region63: #{tpu_custom_call.1} parent=5 // pred_region
        %s723 = ssub.s32 %s20, 2
        // Predicated region
        $region65: #{tpu_custom_call.1} parent=63 // pred_check
          %p724 = pneg %p243
        $region66: #{tpu_custom_call.1} parent=63 // pred_check_branch
          %726 = sbr.rel (%p724) target = $region68
        $region67: #{tpu_custom_call.1} parent=63 // pred_region
          %s727 = sand.u32 %s228, 1
          %s728 = scalar_lea.sflag [#allocation4], %s727
          %s729 = sand.u32 %s228, 1
          %s730 = scalar_lea.vmem [#allocation3], %s729
          %732 = dma.done %s728, 16
        $region68: #{tpu_custom_call.1} parent=63 // pred_fallthru
          _
      $region64: #{tpu_custom_call.1} parent=5 // pred_fallthru
        _
    $region6: #{tpu_custom_call.1} parent=1 // loop_footer
      %s24 = sadd.s32 1, %s20
    $region7: #{tpu_custom_call.1} parent=1 // loop_footer_branch
      %19 = sbr.rel target = $region3
    $region8: #{tpu_custom_call.1} parent=1 // loop_exit
      _
    %733 = vsyncpa [#allocation4], 1
    %s734 = scalar_lea.sflag [#allocation4], 1
    %735 = vsyncpa %s734, 1

</llo_original>
